<compile_context>
chip_gen: v7x
topology: tpu7x:2x2x1
jax: 0.10.0
libtpu: 0.0.40
codegen_flags: <defaults>
</compile_context>

<pallas_src>
import functools

import jax
import jax.numpy as jnp
import numpy as np
from jax.experimental import pallas as pl
from jax.experimental.pallas import tpu as pltpu

NEG_INF = -1e30
LEAKY_SLOPE = 0.01  # torch.nn.functional.leaky_relu default negative_slope


def _leaky_relu(v):
    return jnp.where(v > 0, v, LEAKY_SLOPE * v)


def _round_up(v, m):
    return ((v + m - 1) // m) * m


def _vmem_limit_bytes():
    cap = 128 * 1024 * 1024
    try:
        info = pltpu.get_tpu_info()
        cap = int(getattr(info, "vmem_capacity_bytes", cap))
    except Exception:
        pass
    # ~3/4 of physical, capped: ~48 MiB on v7x (64 MiB/TC), ~96 MiB v5e/v6e.
    return min(100 * 1024 * 1024, (cap * 3) // 4)


# ---------------------------------------------------------------------------
# Pass 1: edge-parallel fused pre-layer + (value | logit) projection
# ---------------------------------------------------------------------------
def edge_mlp_kernel(feat_ref, w1_ref, b1_ref, wlv_ref, blv_ref, lv_ref, *,
                    mm_dt):
    m = (jnp.dot(feat_ref[...], w1_ref[...],
                 preferred_element_type=jnp.float32) + b1_ref[...])
    m = _leaky_relu(m).astype(mm_dt)                      # [TE, pre]
    lv = (jnp.dot(m, wlv_ref[...], preferred_element_type=jnp.float32)
          + blv_ref[...])                                 # [TE, LV_pad]
    lv_ref[...] = lv.astype(lv_ref.dtype)


# ---------------------------------------------------------------------------
# Pass 2: per-destination softmax reduce + output projection
# ---------------------------------------------------------------------------
def reduce_kernel(ebf_ref, ebc_ref,
                  x_ref, cnt_ref, lv_ref, mx_ref, dst_ref,
                  wox_ref, woa_ref, woc_ref, bo_ref,
                  out_ref, acc_ref,
                  *, H, Dh, HD, LV_pad, TN, TE, mm_dt, approx):
    n = pl.program_id(0)
    e = pl.program_id(1)
    last_e = pl.num_programs(1) - 1

    @pl.when(e == 0)
    def _init():
        acc_ref[...] = jnp.zeros_like(acc_ref)

    # accumulate only edge blocks that actually belong to this node tile
    @pl.when(e < ebc_ref[n])
    def _accumulate():
        lv = lv_ref[...]                                  # [TE, LV_pad] f32
        # exact per-destination softmax numerator (mx gathered per edge)
        ex = jnp.exp(lv[:, HD:HD + H] - mx_ref[...])      # [TE, H]

        # build [wev | ex | 0] at full lane-dense width without concatenation:
        # per-head lane broadcasts (VPU selects), no tiny-K expand matmuls.
        col = jax.lax.broadcasted_iota(jnp.int32, (TE, LV_pad), 1)
        ex_full = jnp.zeros((TE, LV_pad), jnp.float32)
        for h in range(H):
            sel = ((col >= h * Dh) & (col < (h + 1) * Dh)) | (col == HD + h)
            ex_full = jnp.where(sel, ex[:, h:h + 1], ex_full)
        is_logit_col = (col >= HD) & (col < HD + H)
        rhs = ex_full * jnp.where(is_logit_col, 1.0, lv)  # [TE, LV_pad]

        # destination one-hot built on-chip (no [N, E] HBM traffic)
        row = jax.lax.broadcasted_iota(jnp.int32, (TN, TE), 0) + n * TN
        dst_oh = (row == dst_ref[...]).astype(mm_dt)      # [TN, TE]

        # ONE fused segment-reduce matmul: numerator and denominator together
        acc_ref[...] += jnp.dot(dst_oh, rhs.astype(mm_dt),
                                preferred_element_type=jnp.float32)

    @pl.when(e == last_e)
    def _finalize():
        acc = acc_ref[...]                                # [TN, LV_pad]
        den = jnp.maximum(acc[:, HD:HD + H], 1e-20)       # isolated nodes -> 0
        inv = pl.reciprocal(den, approx=approx)           # [TN, H]
        colh = jax.lax.broadcasted_iota(jnp.int32, (TN, HD), 1)
        inv_full = jnp.zeros((TN, HD), jnp.float32)
        for h in range(H):
            sel = (colh >= h * Dh) & (colh < (h + 1) * Dh)
            inv_full = jnp.where(sel, inv[:, h:h + 1], inv_full)
        agg = acc[:, :HD] * inv_full                      # [TN, HD]

        out = (jnp.dot(x_ref[...], wox_ref[...],
                       preferred_element_type=jnp.float32)
               + jnp.dot(agg.astype(mm_dt), woa_ref[...],
                         preferred_element_type=jnp.float32)
               + cnt_ref[...] * woc_ref[...]              # count feature
               + bo_ref[...])
        out_ref[...] = _leaky_relu(out).astype(out_ref.dtype)


# ---------------------------------------------------------------------------
# wrapper
# ---------------------------------------------------------------------------
def mha_conv_pallas(x, edge_index, edge_attr, params, num_heads, head_size,
                    *, node_tile=256, edge_tile=1024, use_bf16=True):
    N, c_in = x.shape
    E, c_edge = edge_attr.shape
    H, Dh = num_heads, head_size
    HD = H * Dh
    C = c_in + c_edge
    pre = params["W_pre"].shape[0]
    out_c = params["W_out"].shape[0]
    out_pad = _round_up(out_c, 128)
    LV_pad = _round_up(HD + H, 128)        # fused (values | logits) lane width
    mm_dt = jnp.bfloat16 if use_bf16 else jnp.float32
    vmem_lim = _vmem_limit_bytes()

    # ---- node tiling (>= 2 tiles when possible, for v7x's 2 cores) ---------
    N_pad8 = _round_up(N, 8)
    TN = min(_round_up(node_tile, 8), N_pad8)
    if N_pad8 // TN < 2 and N_pad8 >= 16:
        TN = _round_up(N_pad8 // 2, 8)
    N_pad = _round_up(N_pad8, TN)
    n_tiles = N_pad // TN

    # ---- edge tiling --------------------------------------------------------
    E_pad128 = _round_up(max(E, 1), 128)
    TE = min(_round_up(edge_tile, 128), E_pad128)
    E_pad = _round_up(E_pad128, TE)
    n_eblocks = E_pad // TE

    # ---- host-side: sort edges by destination, per-tile edge-block offsets --
    ei_np = np.asarray(jax.device_get(edge_index))
    src_np = ei_np[0].astype(np.int64)
    dst_np = ei_np[1].astype(np.int64)
    perm_np = np.argsort(dst_np, kind="stable")
    dst_sorted_np = dst_np[perm_np]

    tile_lo = np.arange(n_tiles, dtype=np.int64) * TN
    seg_start = np.searchsorted(dst_sorted_np, tile_lo, side="left")
    seg_end = np.searchsorted(dst_sorted_np, tile_lo + TN, side="left")
    eb_first = np.clip(seg_start // TE, 0, n_eblocks - 1).astype(np.int32)
    eb_count = np.where(seg_end > seg_start,
                        (seg_end - 1) // TE - seg_start // TE + 1,
                        0).astype(np.int32)
    E_STEPS = int(max(1, int(eb_count.max())))

    eb_first_dev = jnp.asarray(eb_first)
    eb_count_dev = jnp.asarray(eb_count)
    perm = jnp.asarray(perm_np.astype(np.int32))
    dst_sorted = jnp.asarray(dst_sorted_np.astype(np.int32))
    src_sorted = jnp.asarray(src_np[perm_np].astype(np.int32))

    # ---- edge-stream inputs: real gather + single concatenated operand ------
    x_j = jnp.take(x, src_sorted, axis=0)                       # [E, c_in]
    ea_s = jnp.take(edge_attr, perm, axis=0)                    # [E, c_edge]
    feat = jnp.concatenate([x_j, ea_s], axis=-1)                # [E, C]
    feat_p = jnp.pad(feat, ((0, E_pad - E), (0, 0))).astype(mm_dt)

    # ---- weights -------------------------------------------------------------
    W_pre, b_pre = params["W_pre"], params["b_pre"]
    W_att, b_att = params["W_att"], params["b_att"]
    W_val, b_val = params["W_val"], params["b_val"]
    W_out, b_out = params["W_out"], params["b_out"]

    w1 = W_pre.T.astype(mm_dt)                                  # [C, pre]
    b1 = b_pre[None, :].astype(jnp.float32)                     # [1, pre]

    W_lv = jnp.zeros((pre, LV_pad), jnp.float32)
    W_lv = W_lv.at[:, :HD].set(W_val.T).at[:, HD:HD + H].set(W_att.T)
    b_lv = jnp.zeros((1, LV_pad), jnp.float32)
    b_lv = b_lv.at[:, :HD].set(b_val[None, :]).at[:, HD:HD + H].set(
        b_att[None, :])
    wlv = W_lv.astype(mm_dt)

    W_out_p = jnp.pad(W_out, ((0, out_pad - out_c), (0, 0)))
    b_out_p = jnp.pad(b_out, (0, out_pad - out_c))
    wox = W_out_p[:, :c_in].T.astype(mm_dt)                     # [c_in,  out_pad]
    woa = W_out_p[:, c_in:c_in + HD].T.astype(mm_dt)            # [HD,    out_pad]
    woc = W_out_p[:, c_in + HD:].T.astype(jnp.float32)          # [1,     out_pad]
    bo = b_out_p[None, :].astype(jnp.float32)                   # [1,     out_pad]

    # ---- pass 1: per-edge fused MLP (runs once per edge) --------------------
    def ew(e): return (0, 0)

    lv = pl.pallas_call(
        functools.partial(edge_mlp_kernel, mm_dt=mm_dt),
        out_shape=jax.ShapeDtypeStruct((E_pad, LV_pad), jnp.float32),
        grid_spec=pltpu.PrefetchScalarGridSpec(
            num_scalar_prefetch=0,
            grid=(E_pad // TE,),
            in_specs=[pl.BlockSpec((TE, C), lambda e: (e, 0)),
                      pl.BlockSpec((C, pre), ew),
                      pl.BlockSpec((1, pre), ew),
                      pl.BlockSpec((pre, LV_pad), ew),
                      pl.BlockSpec((1, LV_pad), ew)],
            out_specs=pl.BlockSpec((TE, LV_pad), lambda e: (e, 0))),
        compiler_params=pltpu.CompilerParams(
            dimension_semantics=("parallel",),
            vmem_limit_bytes=vmem_lim),
    )(feat_p, w1, b1, wlv, b_lv)

    # ---- exact per-destination softmax max, gathered back per edge ----------
    logits_e = lv[:E, HD:HD + H]                                # [E, H]
    seg_max = jnp.full((N, H), -jnp.inf,
                       jnp.float32).at[dst_sorted].max(logits_e)
    mx_e = jnp.take(seg_max, dst_sorted, axis=0)                # [E, H]
    mx_p = jnp.pad(mx_e, ((0, E_pad - E), (0, 0)), constant_values=1e9)

    # destination ids as a [1, E_pad] lane row; padded slots get an
    # out-of-range sentinel so the on-chip one-hot zeroes them.
    dst_pad = np.concatenate([dst_sorted_np.astype(np.int32),
                              np.full(E_pad - E, N_pad, np.int32)])
    dst2d = jnp.asarray(dst_pad)[None, :]                       # [1, E_pad]

    # node-side inputs
    count_np = np.bincount(dst_np, minlength=N).astype(np.float32)
    cnt_p = jnp.asarray(np.pad(count_np, (0, N_pad - N)))[:, None]
    x_p = jnp.pad(x, ((0, N_pad - N), (0, 0))).astype(mm_dt)

    # ---- pass 2: segment softmax-reduce + output projection ------------------
    def n_map(n, e, ebf, ebc): return (n, 0)
    def w_map(n, e, ebf, ebc): return (0, 0)

    def _eblk(n, e, ebf, ebc):
        return ebf[n] + jnp.minimum(e, jnp.maximum(ebc[n] - 1, 0))

    def e_map(n, e, ebf, ebc): return (_eblk(n, e, ebf, ebc), 0)
    def d_map(n, e, ebf, ebc): return (0, _eblk(n, e, ebf, ebc))

    kernel = functools.partial(
        reduce_kernel, H=H, Dh=Dh, HD=HD, LV_pad=LV_pad, TN=TN, TE=TE,
        mm_dt=mm_dt, approx=use_bf16)

    out_padded = pl.pallas_call(
        kernel,
        out_shape=jax.ShapeDtypeStruct((N_pad, out_pad), jnp.float32),
        grid_spec=pltpu.PrefetchScalarGridSpec(
            num_scalar_prefetch=2,
            grid=(n_tiles, E_STEPS),
            in_specs=[
                pl.BlockSpec((TN, c_in), n_map),       # x
                pl.BlockSpec((TN, 1), n_map),          # incoming-edge count
                pl.BlockSpec((TE, LV_pad), e_map),     # fused (values|logits)
                pl.BlockSpec((TE, H), e_map),          # per-edge segment max
                pl.BlockSpec((1, TE), d_map),          # dst ids (lane axis)
                pl.BlockSpec((c_in, out_pad), w_map),  # wox
                pl.BlockSpec((HD, out_pad), w_map),    # woa
                pl.BlockSpec((1, out_pad), w_map),     # woc (count column)
                pl.BlockSpec((1, out_pad), w_map),     # bo
            ],
            out_specs=pl.BlockSpec((TN, out_pad), n_map),
            scratch_shapes=[pltpu.VMEM((TN, LV_pad), jnp.float32)]),
        compiler_params=pltpu.CompilerParams(
            dimension_semantics=("parallel", "arbitrary"),
            vmem_limit_bytes=vmem_lim),
    )(eb_first_dev, eb_count_dev,
      x_p, cnt_p, lv, mx_p, dst2d, wox, woa, woc, bo)

    return out_padded[:N, :out_c]


# ---------------------------------------------------------------------------
# deterministic parameter init (PyTorch Linear-style uniform bounds)
# ---------------------------------------------------------------------------
def _linear_init(key, out_f, in_f):
    k1, k2 = jax.random.split(key)
    bound = 1.0 / np.sqrt(in_f)
    W = jax.random.uniform(k1, (out_f, in_f), jnp.float32, -bound, bound)
    b = jax.random.uniform(k2, (out_f,), jnp.float32, -bound, bound)
    return W, b


def init_params(key, in_channels, edge_channels, out_channels,
                pre_size, num_heads, head_size):
    k1, k2, k3, k4 = jax.random.split(key, 4)
    aggr_out = num_heads * head_size + 1   # +1 for the count feature
    W_pre, b_pre = _linear_init(k1, pre_size, in_channels + edge_channels)
    W_att, b_att = _linear_init(k2, num_heads, pre_size)
    W_val, b_val = _linear_init(k3, num_heads * head_size, pre_size)
    W_out, b_out = _linear_init(k4, out_channels, in_channels + aggr_out)
    return dict(W_pre=W_pre, b_pre=b_pre, W_att=W_att, b_att=b_att,
                W_val=W_val, b_val=b_val, W_out=W_out, b_out=b_out)


# ---------------------------------------------------------------------------
# pure-JAX reference mirroring the PyTorch module semantics
# ---------------------------------------------------------------------------
def reference_forward(x, edge_index, edge_attr, params, num_heads, head_size):
    hp = jax.lax.Precision.HIGHEST

    def mm(a, b):
        return jnp.dot(a, b, precision=hp)

    src, dst = edge_index[0], edge_index[1]
    N = x.shape[0]
    x_j = x[src]
    msg = jnp.concatenate([x_j, edge_attr], axis=-1)
    msg = _leaky_relu(mm(msg, params["W_pre"].T) + params["b_pre"])
    logits = mm(msg, params["W_att"].T) + params["b_att"]        # [E, H]
    vals = mm(msg, params["W_val"].T) + params["b_val"]          # [E, H*Dh]

    mask = jnp.arange(N)[:, None] == dst[None, :]                # [N, E]
    agg_heads = []
    for h in range(num_heads):
        scores = jnp.where(mask, logits[:, h][None, :], NEG_INF)
        mx = scores.max(axis=1, keepdims=True)
        ex = jnp.where(mask, jnp.exp(scores - mx), 0.0)
        den = jnp.maximum(ex.sum(axis=1, keepdims=True), 1e-20)
        alpha = ex / den
        agg_heads.append(mm(alpha, vals[:, h * head_size:(h + 1) * head_size]))
    count = mask.sum(axis=1, keepdims=True).astype(x.dtype)
    messages = jnp.concatenate(agg_heads + [count], axis=-1)
    out_in = jnp.concatenate([x, messages], axis=-1)
    return _leaky_relu(mm(out_in, params["W_out"].T) + params["b_out"])


if __name__ == "__main__":
    key = jax.random.PRNGKey(0)
    N, E = 16, 32
    in_channels, edge_channels = 8, 4
    pre_size, num_heads, head_size, out_channels = 32, 4, 8, 16

    ks = jax.random.split(key, 5)
    x = jax.random.normal(ks[0], (N, in_channels), jnp.float32)
    edge_attr = jax.random.normal(ks[1], (E, edge_channels), jnp.float32)
    src = jax.random.randint(ks[2], (E,), 0, N)
    dst = jax.random.randint(ks[3], (E,), 0, N)
    edge_index = jnp.stack([src, dst])

    params = init_params(ks[4], in_channels, edge_channels, out_channels,
                         pre_size, num_heads, head_size)

    ref = reference_forward(x, edge_index, edge_attr, params,
                            num_heads, head_size)

    # precision path: f32 matmul operands, exact reciprocal
    out_f32 = jax.block_until_ready(
        mha_conv_pallas(x, edge_index, edge_attr, params, num_heads, head_size,
                        use_bf16=False))
    assert out_f32.shape == (N, out_channels)
    np.testing.assert_allclose(np.asarray(out_f32), np.asarray(ref),
                               rtol=1e-4, atol=1e-4)

    # fast path: bf16 MXU operands (f32 accumulation), approximate reciprocal
    out_bf16 = jax.block_until_ready(
        mha_conv_pallas(x, edge_index, edge_attr, params, num_heads, head_size,
                        use_bf16=True))
    assert out_bf16.shape == (N, out_channels)
    np.testing.assert_allclose(np.asarray(out_bf16), np.asarray(ref),
                               rtol=5e-2, atol=5e-2)

    print("KERNEL_OK")
</pallas_src>

<mosaic_0001>
module attributes {stable_mosaic.version = 11 : i64} {
  func.func @edge_mlp_kernel(%arg0: i32, %arg1: memref<128x12xf32, #tpu.memory_space<vmem>>, %arg2: memref<12x32xf32, #tpu.memory_space<vmem>>, %arg3: memref<1x32xf32, #tpu.memory_space<vmem>>, %arg4: memref<32x128xf32, #tpu.memory_space<vmem>>, %arg5: memref<1x128xf32, #tpu.memory_space<vmem>>, %arg6: memref<128x128xf32, #tpu.memory_space<vmem>>) attributes {dimension_semantics = [#tpu.dimension_semantics<parallel>], iteration_bounds = array<i64: 1>, scalar_prefetch = 0 : i64, scratch_operands = 0 : i64, tpu.core_type = #tpu.core_type<tc>, window_params = [{transform_indices = @transform_0, window_bounds = array<i64: 128, 12>}, {pipeline_mode = #tpu.pipeline_mode<synchronous>, transform_indices = @transform_1, window_bounds = array<i64: 12, 32>}, {pipeline_mode = #tpu.pipeline_mode<synchronous>, transform_indices = @transform_2, window_bounds = array<i64: 1, 32>}, {pipeline_mode = #tpu.pipeline_mode<synchronous>, transform_indices = @transform_3, window_bounds = array<i64: 32, 128>}, {pipeline_mode = #tpu.pipeline_mode<synchronous>, transform_indices = @transform_4, window_bounds = array<i64: 1, 128>}, {transform_indices = @transform_5, window_bounds = array<i64: 128, 128>}]} {
    %c0 = arith.constant 0 : index
    %c0_0 = arith.constant 0 : index
    %0 = vector.load %arg1[%c0, %c0_0] : memref<128x12xf32, #tpu.memory_space<vmem>>, vector<128x12xf32>
    %c0_1 = arith.constant 0 : index
    %c0_2 = arith.constant 0 : index
    %1 = vector.load %arg2[%c0_1, %c0_2] : memref<12x32xf32, #tpu.memory_space<vmem>>, vector<12x32xf32>
    %cst = arith.constant dense<0.000000e+00> : vector<128x32xf32>
    %2 = tpu.matmul %0, %1, %cst {dimension_numbers = #tpu.dot_dimension_numbers<[1], [0], [0], [1], [0, 0, 1, 1], [], []>} : vector<128x12xf32>, vector<12x32xf32>, vector<128x32xf32> -> vector<128x32xf32>
    %c0_3 = arith.constant 0 : index
    %c0_4 = arith.constant 0 : index
    %3 = vector.load %arg3[%c0_3, %c0_4] : memref<1x32xf32, #tpu.memory_space<vmem>>, vector<1x32xf32>
    %4 = vector.broadcast %3 : vector<1x32xf32> to vector<128x32xf32>
    %5 = arith.addf %2, %4 : vector<128x32xf32>
    %cst_5 = arith.constant 0.000000e+00 : f32
    %6 = vector.broadcast %cst_5 : f32 to vector<128x32xf32>
    %7 = arith.cmpf ogt, %5, %6 : vector<128x32xf32>
    %cst_6 = arith.constant 0.00999999977 : f32
    %8 = vector.broadcast %cst_6 : f32 to vector<128x32xf32>
    %9 = arith.mulf %8, %5 : vector<128x32xf32>
    %10 = arith.select %7, %5, %9 : vector<128x32xi1>, vector<128x32xf32>
    %c0_7 = arith.constant 0 : index
    %c0_8 = arith.constant 0 : index
    %11 = vector.load %arg4[%c0_7, %c0_8] : memref<32x128xf32, #tpu.memory_space<vmem>>, vector<32x128xf32>
    %cst_9 = arith.constant dense<0.000000e+00> : vector<128x128xf32>
    %12 = tpu.matmul %10, %11, %cst_9 {dimension_numbers = #tpu.dot_dimension_numbers<[1], [0], [0], [1], [0, 0, 1, 1], [], []>} : vector<128x32xf32>, vector<32x128xf32>, vector<128x128xf32> -> vector<128x128xf32>
    %c0_10 = arith.constant 0 : index
    %c0_11 = arith.constant 0 : index
    %13 = vector.load %arg5[%c0_10, %c0_11] : memref<1x128xf32, #tpu.memory_space<vmem>>, vector<1x128xf32>
    %14 = vector.broadcast %13 : vector<1x128xf32> to vector<128x128xf32>
    %15 = arith.addf %12, %14 : vector<128x128xf32>
    %c0_12 = arith.constant 0 : index
    %c0_13 = arith.constant 0 : index
    %16 = vector.load %arg6[%c0_12, %c0_13] : memref<128x128xf32, #tpu.memory_space<vmem>>, vector<128x128xf32>
    tpu.vector_store %arg6[%c0_12, %c0_13], %15 {strides = array<i32>} : memref<128x128xf32, #tpu.memory_space<vmem>>, vector<128x128xf32>,
    return
  }
  func.func @transform_0(%arg0: i32) -> (i32, i32) {
    %c0_i32 = arith.constant 0 : i32
    %c0_i32_0 = arith.constant 0 : i32
    return %arg0, %c0_i32 : i32, i32
  }
  func.func @transform_1(%arg0: i32) -> (i32, i32) {
    %c0_i32 = arith.constant 0 : i32
    %c0_i32_0 = arith.constant 0 : i32
    %c0_i32_1 = arith.constant 0 : i32
    return %c0_i32, %c0_i32_0 : i32, i32
  }
  func.func @transform_2(%arg0: i32) -> (i32, i32) {
    %c0_i32 = arith.constant 0 : i32
    %c0_i32_0 = arith.constant 0 : i32
    %c0_i32_1 = arith.constant 0 : i32
    return %c0_i32, %c0_i32_0 : i32, i32
  }
  func.func @transform_3(%arg0: i32) -> (i32, i32) {
    %c0_i32 = arith.constant 0 : i32
    %c0_i32_0 = arith.constant 0 : i32
    %c0_i32_1 = arith.constant 0 : i32
    return %c0_i32, %c0_i32_0 : i32, i32
  }
  func.func @transform_4(%arg0: i32) -> (i32, i32) {
    %c0_i32 = arith.constant 0 : i32
    %c0_i32_0 = arith.constant 0 : i32
    %c0_i32_1 = arith.constant 0 : i32
    return %c0_i32, %c0_i32_0 : i32, i32
  }
  func.func @transform_5(%arg0: i32) -> (i32, i32) {
    %c0_i32 = arith.constant 0 : i32
    %c0_i32_0 = arith.constant 0 : i32
    return %arg0, %c0_i32 : i32, i32
  }
}

</mosaic_0001>

<llo_original>
// kernel: tpu_custom_call.1
$region0: #{tpu_custom_call.1}
  #allocation0 [shape = 'u32[]', space=smem, size = 0x4, offset = 0x4, fixed_abs, tag = 'smem constant byte address 0x4 - core index']
  #allocation1 [shape = 'u32[144,128]{1,0:T(1,128)}', space=vmem, size = 0x12000, scoped, tag = 'internal scratch']
  %s0 = inlined_call_operand.hbm [shape: f32[128,12], index: 0, kind: input, shape index: {}]
  %s1 = inlined_call_operand.hbm [shape: f32[12,32], index: 1, kind: input, shape index: {}]
  %s2 = inlined_call_operand.hbm [shape: f32[1,32], index: 2, kind: input, shape index: {}]
  %s3 = inlined_call_operand.hbm [shape: f32[32,128], index: 3, kind: input, shape index: {}]
  %s4 = inlined_call_operand.hbm [shape: f32[1,128], index: 4, kind: input, shape index: {}]
  %s5 = inlined_call_operand.hbm [shape: f32[128,128], index: 5, kind: output, shape index: {}]
  %s6 = sld [smem:[#allocation0]]
  $region50: #{tpu_custom_call.1} parent=0
    _
  %s8 = ssub.s32 1, %s6
  %s9 = scalar_select 0, %s8, %s6
  $region1: #{tpu_custom_call.1} parent=0
    #allocation2 [shape = 'u8[65536]{0}', space=vmem, size = 0x10000, scoped, tag = 'input window, operand 0, single buffered']
    #allocation3 [shape = 's32[1]{0}', space=sflag, size = 0x4, scoped, tag = 'scoped memory for tpu_custom_call.1']
    #allocation4 [shape = 's32[1]{0}', space=sflag, size = 0x4, scoped, tag = 'scoped memory for tpu_custom_call.1']
    #allocation5 [shape = 'u8[8192]{0}', space=vmem, size = 0x2000, scoped, tag = 'input window, operand 1, single buffered']
    #allocation6 [shape = 's32[1]{0}', space=sflag, size = 0x4, scoped, tag = 'scoped memory for tpu_custom_call.1']
    #allocation7 [shape = 'u8[512]{0}', space=vmem, size = 0x400, scoped, tag = 'input window, operand 2, single buffered']
    #allocation8 [shape = 'u8[16384]{0}', space=vmem, size = 0x4000, scoped, tag = 'input window, operand 3, single buffered']
    #allocation9 [shape = 's32[1]{0}', space=sflag, size = 0x4, scoped, tag = 'scoped memory for tpu_custom_call.1']
    #allocation10 [shape = 'u8[512]{0}', space=vmem, size = 0x400, scoped, tag = 'input window, operand 4, single buffered']
    #allocation11 [shape = 'u8[65536]{0}', space=vmem, size = 0x10000, scoped, tag = 'output window, operand 0, single buffered']
    %10 = vsyncpa [#allocation3], 0
    %11 = vsyncpa [#allocation6], 0
    %12 = vsyncpa [#allocation9], 0
    %13 = vsyncpa [#allocation4], 0
    // Predicated region
    $region2: #{tpu_custom_call.1} parent=1 // pred_check
      _
    $region3: #{tpu_custom_call.1} parent=1 // pred_check_branch
      %15 = sbr.rel (0) target = $region5
    $region4: #{tpu_custom_call.1} parent=1 // pred_region
      %s17 = ssub.s32 2048, 2048
      %18 = vsyncadd [#allocation3], %s17
      %s19 = sshll.u32 [#allocation2], 4
      %s20 = int_to_ptr.vmem [resolvable:$true] %s19
      %25 = dma.hbm_to_vmem [thread:$0]  %s0, 2048, %s20, [#allocation3], 128, 128, 8
    $region5: #{tpu_custom_call.1} parent=1 // pred_fallthru
      _
    // Predicated region
    $region6: #{tpu_custom_call.1} parent=1 // pred_check
      _
    $region7: #{tpu_custom_call.1} parent=1 // pred_check_branch
      %27 = sbr.rel (0) target = $region9
    $region8: #{tpu_custom_call.1} parent=1 // pred_region
      %s29 = ssub.s32 256, 256
      %30 = vsyncadd [#allocation6], %s29
      %s31 = sshll.u32 [#allocation5], 4
      %s32 = int_to_ptr.vmem [resolvable:$true] %s31
      %37 = dma.hbm_to_vmem [thread:$0]  %s1, 256, %s32, [#allocation6], 128, 128, 8
    $region9: #{tpu_custom_call.1} parent=1 // pred_fallthru
      _
    // Predicated region
    $region10: #{tpu_custom_call.1} parent=1 // pred_check
      _
    $region11: #{tpu_custom_call.1} parent=1 // pred_check_branch
      %39 = sbr.rel (0) target = $region13
    $region12: #{tpu_custom_call.1} parent=1 // pred_region
      %s41 = ssub.s32 16, 16
      %42 = vsyncadd [#allocation6], %s41
      %s44 = sshll.u32 [#allocation7], 4
      %s45 = int_to_ptr.vmem [resolvable:$true] %s44
      %47 = dma.hbm_to_vmem [thread:$0]  %s2, 16, %s45, [#allocation6]
    $region13: #{tpu_custom_call.1} parent=1 // pred_fallthru
      _
    // Predicated region
    $region14: #{tpu_custom_call.1} parent=1 // pred_check
      _
    $region15: #{tpu_custom_call.1} parent=1 // pred_check_branch
      %49 = sbr.rel (0) target = $region17
    $region16: #{tpu_custom_call.1} parent=1 // pred_region
      %s51 = ssub.s32 512, 512
      %52 = vsyncadd [#allocation9], %s51
      %s53 = sshll.u32 [#allocation8], 4
      %s54 = int_to_ptr.vmem [resolvable:$true] %s53
      %59 = dma.hbm_to_vmem [thread:$0]  %s3, 512, %s54, [#allocation9], 128, 128, 8
    $region17: #{tpu_custom_call.1} parent=1 // pred_fallthru
      _
    // Predicated region
    $region18: #{tpu_custom_call.1} parent=1 // pred_check
      _
    $region19: #{tpu_custom_call.1} parent=1 // pred_check_branch
      %61 = sbr.rel (0) target = $region21
    $region20: #{tpu_custom_call.1} parent=1 // pred_region
      %s63 = ssub.s32 16, 16
      %64 = vsyncadd [#allocation9], %s63
      %s66 = sshll.u32 [#allocation10], 4
      %s67 = int_to_ptr.vmem [resolvable:$true] %s66
      %69 = dma.hbm_to_vmem [thread:$0]  %s4, 16, %s67, [#allocation9]
    $region21: #{tpu_custom_call.1} parent=1 // pred_fallthru
      _
    // Predicated region
    $region22: #{tpu_custom_call.1} parent=1 // pred_check
      _
    $region23: #{tpu_custom_call.1} parent=1 // pred_check_branch
      %71 = sbr.rel (0) target = $region25
    $region24: #{tpu_custom_call.1} parent=1 // pred_region
      %72 = dma.done [#allocation3], 2048
    $region25: #{tpu_custom_call.1} parent=1 // pred_fallthru
      _
    // Predicated region
    $region26: #{tpu_custom_call.1} parent=1 // pred_check
      _
    $region27: #{tpu_custom_call.1} parent=1 // pred_check_branch
      %74 = sbr.rel (0) target = $region29
    $region28: #{tpu_custom_call.1} parent=1 // pred_region
      %75 = dma.done [#allocation6], 256
    $region29: #{tpu_custom_call.1} parent=1 // pred_fallthru
      _
    // Predicated region
    $region30: #{tpu_custom_call.1} parent=1 // pred_check
      _
    $region31: #{tpu_custom_call.1} parent=1 // pred_check_branch
      %77 = sbr.rel (0) target = $region33
    $region32: #{tpu_custom_call.1} parent=1 // pred_region
      %78 = dma.done [#allocation6], 16
    $region33: #{tpu_custom_call.1} parent=1 // pred_fallthru
      _
    // Predicated region
    $region34: #{tpu_custom_call.1} parent=1 // pred_check
      _
    $region35: #{tpu_custom_call.1} parent=1 // pred_check_branch
      %80 = sbr.rel (0) target = $region37
    $region36: #{tpu_custom_call.1} parent=1 // pred_region
      %81 = dma.done [#allocation9], 512
    $region37: #{tpu_custom_call.1} parent=1 // pred_fallthru
      _
    // Predicated region
    $region38: #{tpu_custom_call.1} parent=1 // pred_check
      _
    $region39: #{tpu_custom_call.1} parent=1 // pred_check_branch
      %83 = sbr.rel (0) target = $region41
    $region40: #{tpu_custom_call.1} parent=1 // pred_region
      %84 = dma.done [#allocation9], 16
    $region41: #{tpu_custom_call.1} parent=1 // pred_fallthru
      _
    %v85 = vld [vmem:[#allocation2] sm:$0xff]
    %v86 = vld [vmem:[#allocation2 + $0x8] sm:$0xff]
    %v87 = vld [vmem:[#allocation2 + $0x10] sm:$0xff]
    %v88 = vld [vmem:[#allocation2 + $0x18] sm:$0xff]
    %v89 = vld [vmem:[#allocation2 + $0x20] sm:$0xff]
    %v90 = vld [vmem:[#allocation2 + $0x28] sm:$0xff]
    %v91 = vld [vmem:[#allocation2 + $0x30] sm:$0xff]
    %v92 = vld [vmem:[#allocation2 + $0x38] sm:$0xff]
    %v93 = vld [vmem:[#allocation2 + $0x40] sm:$0xff]
    %v94 = vld [vmem:[#allocation2 + $0x48] sm:$0xff]
    %v95 = vld [vmem:[#allocation2 + $0x50] sm:$0xff]
    %v96 = vld [vmem:[#allocation2 + $0x58] sm:$0xff]
    %v97 = vld [vmem:[#allocation2 + $0x60] sm:$0xff]
    %v98 = vld [vmem:[#allocation2 + $0x68] sm:$0xff]
    %v99 = vld [vmem:[#allocation2 + $0x70] sm:$0xff]
    %v100 = vld [vmem:[#allocation2 + $0x78] sm:$0xff]
    %v101 = vld [vmem:[#allocation5] sm:$0xff]
    %v102 = vld [vmem:[#allocation5 + $0x8] sm:$0xf]
    %v103 = vld [vmem:[#allocation7] sm:$0x1]
    %v105 = vlaneseq
    %v106 = vshrl.u32 %v105, 7
    %v107 = vsub.s32 0, %v106
    %v108 = vrot.slane %v103, %v107
    %vm110 = vcmask 97280
    %v112 = vsel %vm110, %v85, 0
    %v115 = vsel %vm110, %v86, 0
    %v118 = vsel %vm110, %v87, 0
    %v121 = vsel %vm110, %v88, 0
    %v124 = vsel %vm110, %v89, 0
    %v127 = vsel %vm110, %v90, 0
    %v130 = vsel %vm110, %v91, 0
    %v133 = vsel %vm110, %v92, 0
    %v136 = vsel %vm110, %v93, 0
    %v139 = vsel %vm110, %v94, 0
    %v142 = vsel %vm110, %v95, 0
    %v145 = vsel %vm110, %v96, 0
    %v148 = vsel %vm110, %v97, 0
    %v151 = vsel %vm110, %v98, 0
    %v154 = vsel %vm110, %v99, 0
    %v157 = vsel %vm110, %v100, 0
    %vm159 = vcmask 1043456
    %v161 = vsel %vm159, %v102, 0
    %163 = vmatprep.subr.mxu0 0.0
    %164 = vmatpush1.msra.mxu0 %v101
    %165 = vmatprep.subr.mxu0 0.0
    %166 = vmatpush1.msra.mxu0 %v161
    %167 = vmatprep.subr.mxu0 0.0
    %168 = vmatpush1.msra.mxu0 0.0
    %169 = vmatprep.subr.mxu0 0.0
    %170 = vmatpush1.msra.mxu0 0.0
    %171 = vmatprep.subr.mxu0 0.0
    %172 = vmatpush1.msra.mxu0 0.0
    %173 = vmatprep.subr.mxu0 0.0
    %174 = vmatpush1.msra.mxu0 0.0
    %175 = vmatprep.subr.mxu0 0.0
    %176 = vmatpush1.msra.mxu0 0.0
    %177 = vmatprep.subr.mxu0 0.0
    %178 = vmatpush1.msra.mxu0 0.0
    %179 = vmatprep.subr.mxu0 0.0
    %180 = vmatpush1.msra.mxu0 0.0
    %181 = vmatprep.subr.mxu0 0.0
    %182 = vmatpush1.msra.mxu0 0.0
    %183 = vmatprep.subr.mxu0 0.0
    %184 = vmatpush1.msra.mxu0 0.0
    %185 = vmatprep.subr.mxu0 0.0
    %186 = vmatpush1.msra.mxu0 0.0
    %187 = vmatprep.subr.mxu0 0.0
    %188 = vmatpush1.msra.mxu0 0.0
    %189 = vmatprep.subr.mxu0 0.0
    %190 = vmatpush1.msra.mxu0 0.0
    %191 = vmatprep.subr.mxu0 0.0
    %192 = vmatpush1.msra.mxu0 0.0
    %193 = vmatprep.subr.mxu0 0.0
    %194 = vmatpush1.msra.mxu0 0.0
    %195 = vmatprep.subr.mxu0 0.0
    %196 = vmatpush1.msra.mxu0 0.0
    %197 = vmatprep.subr.mxu0 0.0
    %198 = vmatpush1.msra.mxu0 0.0
    %199 = vmatprep.subr.mxu0 0.0
    %200 = vmatpush1.msra.mxu0 0.0
    %201 = vmatprep.subr.mxu0 0.0
    %202 = vmatpush1.msra.mxu0 0.0
    %203 = vmatprep.subr.mxu0 0.0
    %204 = vmatpush1.msra.mxu0 0.0
    %205 = vmatprep.subr.mxu0 0.0
    %206 = vmatpush1.msra.mxu0 0.0
    %207 = vmatprep.subr.mxu0 0.0
    %208 = vmatpush1.msra.mxu0 0.0
    %209 = vmatprep.subr.mxu0 0.0
    %210 = vmatpush1.msra.mxu0 0.0
    %211 = vmatprep.subr.mxu0 0.0
    %212 = vmatpush1.msra.mxu0 0.0
    %213 = vmatprep.subr.mxu0 0.0
    %214 = vmatpush1.msra.mxu0 0.0
    %215 = vmatprep.subr.mxu0 0.0
    %216 = vmatpush1.msra.mxu0 0.0
    %217 = vmatprep.subr.mxu0 0.0
    %218 = vmatpush1.msra.mxu0 0.0
    %219 = vmatprep.subr.mxu0 0.0
    %220 = vmatpush1.msra.mxu0 0.0
    %221 = vmatprep.subr.mxu0 0.0
    %222 = vmatpush1.msra.mxu0 0.0
    %223 = vmatprep.subr.mxu0 0.0
    %224 = vmatpush1.msra.mxu0 0.0
    %225 = vmatprep.subr.mxu0 0.0
    %226 = vmatpush1.msra.mxu0 0.0
    %227 = vmatprep.mubr.f32.mxu0 0.0
    %228 = vmatmul.mubr.f32.gmra.mrb[0].mxu0 %v112
    %v229 = vpop.f32.mrb[0].mxu0
    %v230 = vadd.f32 %v108, %v229
    %v231 = vpop.f32.mrb[0].mxu0
    %232 = vmatprep.mubr.f32.mxu0 0.0
    %233 = vmatmul.mubr.f32.gmra.mrb[0].mxu0 %v115
    %v234 = vpop.f32.mrb[0].mxu0
    %v235 = vadd.f32 %v108, %v234
    %v236 = vpop.f32.mrb[0].mxu0
    %237 = vmatprep.mubr.f32.mxu0 0.0
    %238 = vmatmul.mubr.f32.gmra.mrb[0].mxu0 %v118
    %v239 = vpop.f32.mrb[0].mxu0
    %v240 = vadd.f32 %v108, %v239
    %v241 = vpop.f32.mrb[0].mxu0
    %242 = vmatprep.mubr.f32.mxu0 0.0
    %243 = vmatmul.mubr.f32.gmra.mrb[0].mxu0 %v121
    %v244 = vpop.f32.mrb[0].mxu0
    %v245 = vadd.f32 %v108, %v244
    %v246 = vpop.f32.mrb[0].mxu0
    %247 = vmatprep.mubr.f32.mxu0 0.0
    %248 = vmatmul.mubr.f32.gmra.mrb[0].mxu0 %v124
    %v249 = vpop.f32.mrb[0].mxu0
    %v250 = vadd.f32 %v108, %v249
    %v251 = vpop.f32.mrb[0].mxu0
    %252 = vmatprep.mubr.f32.mxu0 0.0
    %253 = vmatmul.mubr.f32.gmra.mrb[0].mxu0 %v127
    %v254 = vpop.f32.mrb[0].mxu0
    %v255 = vadd.f32 %v108, %v254
    %v256 = vpop.f32.mrb[0].mxu0
    %257 = vmatprep.mubr.f32.mxu0 0.0
    %258 = vmatmul.mubr.f32.gmra.mrb[0].mxu0 %v130
    %v259 = vpop.f32.mrb[0].mxu0
    %v260 = vadd.f32 %v108, %v259
    %v261 = vpop.f32.mrb[0].mxu0
    %262 = vmatprep.mubr.f32.mxu0 0.0
    %263 = vmatmul.mubr.f32.gmra.mrb[0].mxu0 %v133
    %v264 = vpop.f32.mrb[0].mxu0
    %v265 = vadd.f32 %v108, %v264
    %v266 = vpop.f32.mrb[0].mxu0
    %267 = vmatprep.mubr.f32.mxu0 0.0
    %268 = vmatmul.mubr.f32.gmra.mrb[0].mxu0 %v136
    %v269 = vpop.f32.mrb[0].mxu0
    %v270 = vadd.f32 %v108, %v269
    %v271 = vpop.f32.mrb[0].mxu0
    %272 = vmatprep.mubr.f32.mxu0 0.0
    %273 = vmatmul.mubr.f32.gmra.mrb[0].mxu0 %v139
    %v274 = vpop.f32.mrb[0].mxu0
    %v275 = vadd.f32 %v108, %v274
    %v276 = vpop.f32.mrb[0].mxu0
    %277 = vmatprep.mubr.f32.mxu0 0.0
    %278 = vmatmul.mubr.f32.gmra.mrb[0].mxu0 %v142
    %v279 = vpop.f32.mrb[0].mxu0
    %v280 = vadd.f32 %v108, %v279
    %v281 = vpop.f32.mrb[0].mxu0
    %282 = vmatprep.mubr.f32.mxu0 0.0
    %283 = vmatmul.mubr.f32.gmra.mrb[0].mxu0 %v145
    %v284 = vpop.f32.mrb[0].mxu0
    %v285 = vadd.f32 %v108, %v284
    %v286 = vpop.f32.mrb[0].mxu0
    %287 = vmatprep.mubr.f32.mxu0 0.0
    %288 = vmatmul.mubr.f32.gmra.mrb[0].mxu0 %v148
    %v289 = vpop.f32.mrb[0].mxu0
    %v290 = vadd.f32 %v108, %v289
    %v291 = vpop.f32.mrb[0].mxu0
    %292 = vmatprep.mubr.f32.mxu0 0.0
    %293 = vmatmul.mubr.f32.gmra.mrb[0].mxu0 %v151
    %v294 = vpop.f32.mrb[0].mxu0
    %v295 = vadd.f32 %v108, %v294
    %v296 = vpop.f32.mrb[0].mxu0
    %297 = vmatprep.mubr.f32.mxu0 0.0
    %298 = vmatmul.mubr.f32.gmra.mrb[0].mxu0 %v154
    %v299 = vpop.f32.mrb[0].mxu0
    %v300 = vadd.f32 %v108, %v299
    %v301 = vpop.f32.mrb[0].mxu0
    %302 = vmatprep.mubr.f32.mxu0 0.0
    %303 = vmatmul.mubr.f32.gmra.mrb[0].mxu0 %v157
    %v304 = vpop.f32.mrb[0].mxu0
    %v305 = vadd.f32 %v108, %v304
    %v306 = vpop.f32.mrb[0].mxu0
    %307 = vdwg.mxu0
    %vm308 = vcmp.gt.f32.partialorder %v230, 0.0
    %vm309 = vcmp.gt.f32.partialorder %v235, 0.0
    %vm310 = vcmp.gt.f32.partialorder %v240, 0.0
    %vm311 = vcmp.gt.f32.partialorder %v245, 0.0
    %vm312 = vcmp.gt.f32.partialorder %v250, 0.0
    %vm313 = vcmp.gt.f32.partialorder %v255, 0.0
    %vm314 = vcmp.gt.f32.partialorder %v260, 0.0
    %vm315 = vcmp.gt.f32.partialorder %v265, 0.0
    %vm316 = vcmp.gt.f32.partialorder %v270, 0.0
    %vm317 = vcmp.gt.f32.partialorder %v275, 0.0
    %vm318 = vcmp.gt.f32.partialorder %v280, 0.0
    %vm319 = vcmp.gt.f32.partialorder %v285, 0.0
    %vm320 = vcmp.gt.f32.partialorder %v290, 0.0
    %vm321 = vcmp.gt.f32.partialorder %v295, 0.0
    %vm322 = vcmp.gt.f32.partialorder %v300, 0.0
    %vm323 = vcmp.gt.f32.partialorder %v305, 0.0
    %v324 = vmul.f32 %v230, 0.01
    %v325 = vmul.f32 %v235, 0.01
    %v326 = vmul.f32 %v240, 0.01
    %v327 = vmul.f32 %v245, 0.01
    %v328 = vmul.f32 %v250, 0.01
    %v329 = vmul.f32 %v255, 0.01
    %v330 = vmul.f32 %v260, 0.01
    %v331 = vmul.f32 %v265, 0.01
    %v332 = vmul.f32 %v270, 0.01
    %v333 = vmul.f32 %v275, 0.01
    %v334 = vmul.f32 %v280, 0.01
    %v335 = vmul.f32 %v285, 0.01
    %v336 = vmul.f32 %v290, 0.01
    %v337 = vmul.f32 %v295, 0.01
    %v338 = vmul.f32 %v300, 0.01
    %v339 = vmul.f32 %v305, 0.01
    %v340 = vsel %vm308, %v230, %v324
    %v341 = vsel %vm309, %v235, %v325
    %v342 = vsel %vm310, %v240, %v326
    %v343 = vsel %vm311, %v245, %v327
    %v344 = vsel %vm312, %v250, %v328
    %v345 = vsel %vm313, %v255, %v329
    %v346 = vsel %vm314, %v260, %v330
    %v347 = vsel %vm315, %v265, %v331
    %v348 = vsel %vm316, %v270, %v332
    %v349 = vsel %vm317, %v275, %v333
    %v350 = vsel %vm318, %v280, %v334
    %v351 = vsel %vm319, %v285, %v335
    %v352 = vsel %vm320, %v290, %v336
    %v353 = vsel %vm321, %v295, %v337
    %v354 = vsel %vm322, %v300, %v338
    %v355 = vsel %vm323, %v305, %v339
    %v356 = vld [vmem:[#allocation8] sm:$0xff]
    %v357 = vld [vmem:[#allocation8 + $0x8] sm:$0xff]
    %v358 = vld [vmem:[#allocation8 + $0x10] sm:$0xff]
    %v359 = vld [vmem:[#allocation8 + $0x18] sm:$0xff]
    %v360 = vld [vmem:[#allocation10] sm:$0x1]
    %v362 = vlaneseq
    %v363 = vshrl.u32 %v362, 7
    %v364 = vsub.s32 0, %v363
    %v365 = vrot.slane %v360, %v364
    %vm367 = vcmask 261120
    %v369 = vsel %vm367, %v340, 0
    %v372 = vsel %vm367, %v341, 0
    %v375 = vsel %vm367, %v342, 0
    %v378 = vsel %vm367, %v343, 0
    %v381 = vsel %vm367, %v344, 0
    %v384 = vsel %vm367, %v345, 0
    %v387 = vsel %vm367, %v346, 0
    %v390 = vsel %vm367, %v347, 0
    %v393 = vsel %vm367, %v348, 0
    %v396 = vsel %vm367, %v349, 0
    %v399 = vsel %vm367, %v350, 0
    %v402 = vsel %vm367, %v351, 0
    %v405 = vsel %vm367, %v352, 0
    %v408 = vsel %vm367, %v353, 0
    %v411 = vsel %vm367, %v354, 0
    %v414 = vsel %vm367, %v355, 0
    %416 = vmatprep.subr.mxu0 0.0
    %417 = vmatpush1.msra.mxu0 %v356
    %418 = vmatprep.subr.mxu0 0.0
    %419 = vmatpush1.msra.mxu0 %v357
    %420 = vmatprep.subr.mxu0 0.0
    %421 = vmatpush1.msra.mxu0 %v358
    %422 = vmatprep.subr.mxu0 0.0
    %423 = vmatpush1.msra.mxu0 %v359
    %424 = vmatprep.subr.mxu0 0.0
    %425 = vmatpush1.msra.mxu0 0.0
    %426 = vmatprep.subr.mxu0 0.0
    %427 = vmatpush1.msra.mxu0 0.0
    %428 = vmatprep.subr.mxu0 0.0
    %429 = vmatpush1.msra.mxu0 0.0
    %430 = vmatprep.subr.mxu0 0.0
    %431 = vmatpush1.msra.mxu0 0.0
    %432 = vmatprep.subr.mxu0 0.0
    %433 = vmatpush1.msra.mxu0 0.0
    %434 = vmatprep.subr.mxu0 0.0
    %435 = vmatpush1.msra.mxu0 0.0
    %436 = vmatprep.subr.mxu0 0.0
    %437 = vmatpush1.msra.mxu0 0.0
    %438 = vmatprep.subr.mxu0 0.0
    %439 = vmatpush1.msra.mxu0 0.0
    %440 = vmatprep.subr.mxu0 0.0
    %441 = vmatpush1.msra.mxu0 0.0
    %442 = vmatprep.subr.mxu0 0.0
    %443 = vmatpush1.msra.mxu0 0.0
    %444 = vmatprep.subr.mxu0 0.0
    %445 = vmatpush1.msra.mxu0 0.0
    %446 = vmatprep.subr.mxu0 0.0
    %447 = vmatpush1.msra.mxu0 0.0
    %448 = vmatprep.subr.mxu0 0.0
    %449 = vmatpush1.msra.mxu0 0.0
    %450 = vmatprep.subr.mxu0 0.0
    %451 = vmatpush1.msra.mxu0 0.0
    %452 = vmatprep.subr.mxu0 0.0
    %453 = vmatpush1.msra.mxu0 0.0
    %454 = vmatprep.subr.mxu0 0.0
    %455 = vmatpush1.msra.mxu0 0.0
    %456 = vmatprep.subr.mxu0 0.0
    %457 = vmatpush1.msra.mxu0 0.0
    %458 = vmatprep.subr.mxu0 0.0
    %459 = vmatpush1.msra.mxu0 0.0
    %460 = vmatprep.subr.mxu0 0.0
    %461 = vmatpush1.msra.mxu0 0.0
    %462 = vmatprep.subr.mxu0 0.0
    %463 = vmatpush1.msra.mxu0 0.0
    %464 = vmatprep.subr.mxu0 0.0
    %465 = vmatpush1.msra.mxu0 0.0
    %466 = vmatprep.subr.mxu0 0.0
    %467 = vmatpush1.msra.mxu0 0.0
    %468 = vmatprep.subr.mxu0 0.0
    %469 = vmatpush1.msra.mxu0 0.0
    %470 = vmatprep.subr.mxu0 0.0
    %471 = vmatpush1.msra.mxu0 0.0
    %472 = vmatprep.subr.mxu0 0.0
    %473 = vmatpush1.msra.mxu0 0.0
    %474 = vmatprep.subr.mxu0 0.0
    %475 = vmatpush1.msra.mxu0 0.0
    %476 = vmatprep.subr.mxu0 0.0
    %477 = vmatpush1.msra.mxu0 0.0
    %478 = vmatprep.subr.mxu0 0.0
    %479 = vmatpush1.msra.mxu0 0.0
    %480 = vmatprep.mubr.f32.mxu0 0.0
    %481 = vmatmul.mubr.f32.gmra.mrb[0].mxu0 %v369
    %v482 = vpop.f32.mrb[0].mxu0
    %v483 = vadd.f32 %v365, %v482
    %v484 = vpop.f32.mrb[0].mxu0
    %485 = vmatprep.mubr.f32.mxu0 0.0
    %486 = vmatmul.mubr.f32.gmra.mrb[0].mxu0 %v372
    %v487 = vpop.f32.mrb[0].mxu0
    %v488 = vadd.f32 %v365, %v487
    %v489 = vpop.f32.mrb[0].mxu0
    %490 = vmatprep.mubr.f32.mxu0 0.0
    %491 = vmatmul.mubr.f32.gmra.mrb[0].mxu0 %v375
    %v492 = vpop.f32.mrb[0].mxu0
    %v493 = vadd.f32 %v365, %v492
    %v494 = vpop.f32.mrb[0].mxu0
    %495 = vmatprep.mubr.f32.mxu0 0.0
    %496 = vmatmul.mubr.f32.gmra.mrb[0].mxu0 %v378
    %v497 = vpop.f32.mrb[0].mxu0
    %v498 = vadd.f32 %v365, %v497
    %v499 = vpop.f32.mrb[0].mxu0
    %500 = vmatprep.mubr.f32.mxu0 0.0
    %501 = vmatmul.mubr.f32.gmra.mrb[0].mxu0 %v381
    %v502 = vpop.f32.mrb[0].mxu0
    %v503 = vadd.f32 %v365, %v502
    %v504 = vpop.f32.mrb[0].mxu0
    %505 = vmatprep.mubr.f32.mxu0 0.0
    %506 = vmatmul.mubr.f32.gmra.mrb[0].mxu0 %v384
    %v507 = vpop.f32.mrb[0].mxu0
    %v508 = vadd.f32 %v365, %v507
    %v509 = vpop.f32.mrb[0].mxu0
    %510 = vmatprep.mubr.f32.mxu0 0.0
    %511 = vmatmul.mubr.f32.gmra.mrb[0].mxu0 %v387
    %v512 = vpop.f32.mrb[0].mxu0
    %v513 = vadd.f32 %v365, %v512
    %v514 = vpop.f32.mrb[0].mxu0
    %515 = vmatprep.mubr.f32.mxu0 0.0
    %516 = vmatmul.mubr.f32.gmra.mrb[0].mxu0 %v390
    %v517 = vpop.f32.mrb[0].mxu0
    %v518 = vadd.f32 %v365, %v517
    %v519 = vpop.f32.mrb[0].mxu0
    %520 = vmatprep.mubr.f32.mxu0 0.0
    %521 = vmatmul.mubr.f32.gmra.mrb[0].mxu0 %v393
    %v522 = vpop.f32.mrb[0].mxu0
    %v523 = vadd.f32 %v365, %v522
    %v524 = vpop.f32.mrb[0].mxu0
    %525 = vmatprep.mubr.f32.mxu0 0.0
    %526 = vmatmul.mubr.f32.gmra.mrb[0].mxu0 %v396
    %v527 = vpop.f32.mrb[0].mxu0
    %v528 = vadd.f32 %v365, %v527
    %v529 = vpop.f32.mrb[0].mxu0
    %530 = vmatprep.mubr.f32.mxu0 0.0
    %531 = vmatmul.mubr.f32.gmra.mrb[0].mxu0 %v399
    %v532 = vpop.f32.mrb[0].mxu0
    %v533 = vadd.f32 %v365, %v532
    %v534 = vpop.f32.mrb[0].mxu0
    %535 = vmatprep.mubr.f32.mxu0 0.0
    %536 = vmatmul.mubr.f32.gmra.mrb[0].mxu0 %v402
    %v537 = vpop.f32.mrb[0].mxu0
    %v538 = vadd.f32 %v365, %v537
    %v539 = vpop.f32.mrb[0].mxu0
    %540 = vmatprep.mubr.f32.mxu0 0.0
    %541 = vmatmul.mubr.f32.gmra.mrb[0].mxu0 %v405
    %v542 = vpop.f32.mrb[0].mxu0
    %v543 = vadd.f32 %v365, %v542
    %v544 = vpop.f32.mrb[0].mxu0
    %545 = vmatprep.mubr.f32.mxu0 0.0
    %546 = vmatmul.mubr.f32.gmra.mrb[0].mxu0 %v408
    %v547 = vpop.f32.mrb[0].mxu0
    %v548 = vadd.f32 %v365, %v547
    %v549 = vpop.f32.mrb[0].mxu0
    %550 = vmatprep.mubr.f32.mxu0 0.0
    %551 = vmatmul.mubr.f32.gmra.mrb[0].mxu0 %v411
    %v552 = vpop.f32.mrb[0].mxu0
    %v553 = vadd.f32 %v365, %v552
    %v554 = vpop.f32.mrb[0].mxu0
    %555 = vmatprep.mubr.f32.mxu0 0.0
    %556 = vmatmul.mubr.f32.gmra.mrb[0].mxu0 %v414
    %v557 = vpop.f32.mrb[0].mxu0
    %v558 = vadd.f32 %v365, %v557
    %v559 = vpop.f32.mrb[0].mxu0
    %560 = vdwg.mxu0
    %561 = vst [vmem:[#allocation11] sm:$0xff] %v483
    %562 = vst [vmem:[#allocation11 + $0x8] sm:$0xff] %v488
    %563 = vst [vmem:[#allocation11 + $0x10] sm:$0xff] %v493
    %564 = vst [vmem:[#allocation11 + $0x18] sm:$0xff] %v498
    %565 = vst [vmem:[#allocation11 + $0x20] sm:$0xff] %v503
    %566 = vst [vmem:[#allocation11 + $0x28] sm:$0xff] %v508
    %567 = vst [vmem:[#allocation11 + $0x30] sm:$0xff] %v513
    %568 = vst [vmem:[#allocation11 + $0x38] sm:$0xff] %v518
    %569 = vst [vmem:[#allocation11 + $0x40] sm:$0xff] %v523
    %570 = vst [vmem:[#allocation11 + $0x48] sm:$0xff] %v528
    %571 = vst [vmem:[#allocation11 + $0x50] sm:$0xff] %v533
    %572 = vst [vmem:[#allocation11 + $0x58] sm:$0xff] %v538
    %573 = vst [vmem:[#allocation11 + $0x60] sm:$0xff] %v543
    %574 = vst [vmem:[#allocation11 + $0x68] sm:$0xff] %v548
    %575 = vst [vmem:[#allocation11 + $0x70] sm:$0xff] %v553
    %576 = vst [vmem:[#allocation11 + $0x78] sm:$0xff] %v558
    // Predicated region
    $region42: #{tpu_custom_call.1} parent=1 // pred_check
      _
    $region43: #{tpu_custom_call.1} parent=1 // pred_check_branch
      %578 = sbr.rel (0) target = $region45
    $region44: #{tpu_custom_call.1} parent=1 // pred_region
      %s580 = ssub.s32 2048, 2048
      %581 = vsyncadd [#allocation4], %s580
      %s582 = sshll.u32 [#allocation11], 4
      %s583 = int_to_ptr.vmem [resolvable:$true] %s582
      %588 = dma.vmem_to_hbm [thread:$0]  %s583, 2048, %s5, [#allocation4], 128, 128, 8
    $region45: #{tpu_custom_call.1} parent=1 // pred_fallthru
      _
    // Predicated region
    $region46: #{tpu_custom_call.1} parent=1 // pred_check
      _
    $region47: #{tpu_custom_call.1} parent=1 // pred_check_branch
      %590 = sbr.rel (0) target = $region49
    $region48: #{tpu_custom_call.1} parent=1 // pred_region
      %591 = dma.done [#allocation4], 2048
    $region49: #{tpu_custom_call.1} parent=1 // pred_fallthru
      _
    %592 = vsyncpa [#allocation3], 1
    %593 = vsyncpa [#allocation6], 1
    %594 = vsyncpa [#allocation9], 1
    %595 = vsyncpa [#allocation4], 1

</llo_original>
